<compile_context>
chip_gen: v5e
topology: v5e:2x2
jax: 0.10.0
libtpu: 0.0.40
codegen_flags: <defaults>
</compile_context>

<pallas_src>
import math

import jax
import jax.numpy as jnp
from jax.experimental import pallas as pl
from jax.experimental.pallas import tpu as pltpu

_STATS_LANES = 128  # lane-dense packed slab: col0=mode, col1=entropy, col2=param_reg


def _dist_categorical_kernel(x_ref, wt_ref, b_ref, logits_ref, stats_ref):
    x = x_ref[...]                             # (TB, in)   float32
    wt = wt_ref[...]                           # (in, out)  float32, K-major RHS
    b = b_ref[...]                             # (1, out)   float32

    # Linear: raw = x @ W^T + b.  Weight was transposed once in the wrapper,
    # so this is a canonical ((1,),(0,)) contraction straight onto the MXU.
    raw = jnp.dot(x, wt, preferred_element_type=jnp.float32) + b   # (TB, out)

    # One max / one exp / one sum, reused everywhere below.
    m = jnp.max(raw, axis=-1, keepdims=True)                       # (TB, 1)
    e = jnp.exp(raw - m)                                           # (TB, out)
    s = jnp.sum(e, axis=-1, keepdims=True)                         # (TB, 1)
    logz = m + jnp.log(s)                                          # (TB, 1)

    # Categorical normalization: logits = raw - logsumexp(raw, -1)
    logits = raw - logz                                            # (TB, out)
    logits_ref[...] = logits

    # mode = first argmax (torch tie-breaking), reusing m (compare on raw).
    idx = jax.lax.broadcasted_iota(jnp.int32, raw.shape, 1)
    big = jnp.iinfo(jnp.int32).max
    mode = jnp.min(jnp.where(raw == m, idx, big), axis=-1, keepdims=True)

    # entropy = -sum(p * logp) = logZ - sum(e * raw) / s
    # (exact per-row scalar division; no full-width p array materialized).
    ent = logz - jnp.sum(e * raw, axis=-1, keepdims=True) / s      # (TB, 1)

    # param_reg = sum(logits**2)
    reg = jnp.sum(logits * logits, axis=-1, keepdims=True)         # (TB, 1)

    # Pack the three per-row scalars into one lane-dense slab (unmasked store).
    lane = jax.lax.broadcasted_iota(jnp.int32, stats_ref.shape, 1)  # (TB, 128)
    stats_ref[...] = jnp.where(lane == 0, mode.astype(jnp.float32),
                               jnp.where(lane == 1, ent, reg))


def _round_up(n, m):
    return -(-n // m) * m


def _pick_block_b(batch, in_size, out_size):
    """VMEM-budget-driven batch tile, >=2 grid steps when batch > 8."""
    if batch <= 8:
        return batch  # full-dim block (allowed even if < 8 rows); grid = (1,)
    # Budget: conservative headroom under v7x's 64 MiB physical per-TC VMEM.
    budget = 48 << 20
    fixed = (out_size * in_size + out_size) * 4          # weight + bias, single-buffered
    per_row = 2 * (in_size + out_size + _STATS_LANES) * 4  # double-buffered x/logits/stats
    avail = max(budget - fixed, 8 * per_row)
    tb_cap = max(8, (avail // per_row) // 8 * 8)
    tb = min(1024, tb_cap)
    # At least 2 grid steps (v7x megacore), balanced tiles (e.g. 520 -> 2x264+..., not 512+8).
    steps = max(2, pl.cdiv(batch, tb))
    tb = min(tb, _round_up(pl.cdiv(batch, steps), 8))
    return max(8, tb)


def dist_categorical_forward(x, weight, bias, block_b=None):
    """Returns (logits, mode, entropy, param_reg) with torch-matching shapes.

    x:      (B, in_size) float32
    weight: (out_size, in_size) float32   (torch nn.Linear layout)
    bias:   (out_size,) float32
    """
    B, in_size = x.shape
    out_size = weight.shape[0]

    # One-time wrapper-side layout plumbing (amortized across all batch tiles):
    w_t = weight.T                       # (in, out), canonical K-major MXU RHS
    bias2d = bias.reshape(1, out_size)

    tb = _pick_block_b(B, in_size, out_size) if block_b is None else block_b
    grid = (pl.cdiv(B, tb),)

    # Scoped VMEM: weight+bias single-buffered + double-buffered per-tile slabs.
    needed = ((out_size * in_size + out_size) * 4
              + 2 * tb * (in_size + out_size + _STATS_LANES) * 4)
    vmem_limit = min(64 << 20, max(32 << 20, int(needed * 1.25)))

    logits2d, stats = pl.pallas_call(
        _dist_categorical_kernel,
        out_shape=(
            jax.ShapeDtypeStruct((B, out_size), jnp.float32),
            jax.ShapeDtypeStruct((B, _STATS_LANES), jnp.float32),
        ),
        grid=grid,
        in_specs=[
            pl.BlockSpec((tb, in_size), lambda i: (i, 0)),          # x tile (pipelined)
            pl.BlockSpec((in_size, out_size), lambda i: (0, 0),     # weight, VMEM-resident
                         pipeline_mode=pl.Buffered(1)),             #   single-buffered
            pl.BlockSpec((1, out_size), lambda i: (0, 0),           # bias, VMEM-resident
                         pipeline_mode=pl.Buffered(1)),
        ],
        out_specs=(
            pl.BlockSpec((tb, out_size), lambda i: (i, 0)),
            pl.BlockSpec((tb, _STATS_LANES), lambda i: (i, 0)),
        ),
        compiler_params=pltpu.CompilerParams(
            dimension_semantics=("parallel",),
            vmem_limit_bytes=vmem_limit),
    )(x, w_t, bias2d)

    # Glue to the torch module's output conventions (free/metadata-level ops):
    logits = logits2d[:, None, :]              # dist.logits      -> (B, 1, out)
    mode = stats[:, 0:1].astype(jnp.int32)     # dist.mode        -> (B, 1)
    ent = stats[:, 1]                          # dist.entropy()   -> (B,)
    reg = stats[:, 2]                          # dist.param_reg() -> (B,)
    return logits, mode, ent, reg


def init_params(key, in_size, out_size, init_output_scale=0.01):
    """Deterministic init matching the torch module's __init__ semantics."""
    kw, kb = jax.random.split(key)
    # torch.nn.init.uniform_(weight, -scale, scale)
    weight = jax.random.uniform(
        kw, (out_size, in_size), jnp.float32,
        minval=-init_output_scale, maxval=init_output_scale)
    # torch Linear default bias init: U(-1/sqrt(in), 1/sqrt(in))
    bound = 1.0 / math.sqrt(in_size)
    bias = jax.random.uniform(
        kb, (out_size,), jnp.float32, minval=-bound, maxval=bound)
    return weight, bias


def _reference(x, weight, bias):
    raw = x @ weight.T + bias
    logits = (raw - jax.nn.logsumexp(raw, axis=-1, keepdims=True))[:, None, :]
    mode = jnp.argmax(logits, axis=-1).astype(jnp.int32)
    p = jnp.exp(logits)
    ent = -jnp.sum(p * logits, axis=-1)[:, 0]
    reg = jnp.sum(logits ** 2, axis=-1)[:, 0]
    return logits, mode, ent, reg


def _check(x, weight, bias, block_b=None):
    logits, mode, ent, reg = dist_categorical_forward(x, weight, bias, block_b=block_b)
    jax.block_until_ready((logits, mode, ent, reg))
    logits_r, mode_r, ent_r, reg_r = _reference(x, weight, bias)

    B, out_size = x.shape[0], weight.shape[0]
    assert logits.shape == (B, 1, out_size)
    assert mode.shape == (B, 1)
    assert ent.shape == (B,)
    assert reg.shape == (B,)
    assert jnp.allclose(logits, logits_r, atol=1e-5)
    assert jnp.array_equal(mode, mode_r)
    assert jnp.allclose(ent, ent_r, atol=1e-4)   # exact math now (no approx reciprocal)
    assert jnp.allclose(reg, reg_r, atol=1e-4)


if __name__ == "__main__":
    key = jax.random.PRNGKey(0)
    k_in, k_param, k_in2 = jax.random.split(key, 3)

    # Small toy shape consistent with the module.
    B, in_size, out_size = 8, 32, 16
    weight, bias = init_params(k_param, in_size, out_size)

    x = jax.random.normal(k_in, (B, in_size), jnp.float32)
    _check(x, weight, bias)                       # single-block path (grid=(1,))

    # Exercise the batched grid (multiple pipelined batch tiles, "parallel" axis).
    x2 = jax.random.normal(k_in2, (48, in_size), jnp.float32)
    _check(x2, weight, bias)                      # auto tile -> balanced 2-step grid
    _check(x2, weight, bias, block_b=16)          # explicit tile -> grid = (3,)

    print("KERNEL_OK")
</pallas_src>

<mosaic_0001>
module attributes {stable_mosaic.version = 11 : i64} {
  func.func @_dist_categorical_kernel(%arg0: i32, %arg1: memref<8x32xf32, #tpu.memory_space<vmem>>, %arg2: memref<32x16xf32, #tpu.memory_space<vmem>>, %arg3: memref<1x16xf32, #tpu.memory_space<vmem>>, %arg4: memref<8x16xf32, #tpu.memory_space<vmem>>, %arg5: memref<8x128xf32, #tpu.memory_space<vmem>>) attributes {dimension_semantics = [#tpu.dimension_semantics<parallel>], iteration_bounds = array<i64: 1>, scalar_prefetch = 0 : i64, scratch_operands = 0 : i64, tpu.core_type = #tpu.core_type<tc>, window_params = [{transform_indices = @transform_0, window_bounds = array<i64: 8, 32>}, {pipeline_mode = #tpu.pipeline_mode<synchronous>, transform_indices = @transform_1, window_bounds = array<i64: 32, 16>}, {pipeline_mode = #tpu.pipeline_mode<synchronous>, transform_indices = @transform_2, window_bounds = array<i64: 1, 16>}, {transform_indices = @transform_3, window_bounds = array<i64: 8, 16>}, {transform_indices = @transform_4, window_bounds = array<i64: 8, 128>}]} {
    %c0 = arith.constant 0 : index
    %c0_0 = arith.constant 0 : index
    %0 = vector.load %arg1[%c0, %c0_0] : memref<8x32xf32, #tpu.memory_space<vmem>>, vector<8x32xf32>
    %c0_1 = arith.constant 0 : index
    %c0_2 = arith.constant 0 : index
    %1 = vector.load %arg2[%c0_1, %c0_2] : memref<32x16xf32, #tpu.memory_space<vmem>>, vector<32x16xf32>
    %c0_3 = arith.constant 0 : index
    %c0_4 = arith.constant 0 : index
    %2 = vector.load %arg3[%c0_3, %c0_4] : memref<1x16xf32, #tpu.memory_space<vmem>>, vector<1x16xf32>
    %cst = arith.constant dense<0.000000e+00> : vector<8x16xf32>
    %3 = tpu.matmul %0, %1, %cst {dimension_numbers = #tpu.dot_dimension_numbers<[1], [0], [0], [1], [0, 0, 1, 1], [], []>} : vector<8x32xf32>, vector<32x16xf32>, vector<8x16xf32> -> vector<8x16xf32>
    %4 = vector.broadcast %2 : vector<1x16xf32> to vector<8x16xf32>
    %5 = arith.addf %3, %4 : vector<8x16xf32>
    %cst_5 = arith.constant dense<0xFF800000> : vector<8xf32>
    %6 = vector.multi_reduction <maximumf>, %5, %cst_5 [1] : vector<8x16xf32> to vector<8xf32>
    %7 = vector.shape_cast %6 : vector<8xf32> to vector<8x1xf32>
    %8 = vector.broadcast %7 : vector<8x1xf32> to vector<8x16xf32>
    %9 = arith.subf %5, %8 : vector<8x16xf32>
    %10 = math.exp %9 : vector<8x16xf32>
    %cst_6 = arith.constant dense<0.000000e+00> : vector<8xf32>
    %11 = vector.multi_reduction <add>, %10, %cst_6 [1] : vector<8x16xf32> to vector<8xf32>
    %12 = vector.shape_cast %11 : vector<8xf32> to vector<8x1xf32>
    %13 = math.log %12 : vector<8x1xf32>
    %14 = arith.addf %7, %13 : vector<8x1xf32>
    %15 = vector.broadcast %14 : vector<8x1xf32> to vector<8x16xf32>
    %16 = arith.subf %5, %15 : vector<8x16xf32>
    %c0_7 = arith.constant 0 : index
    %c0_8 = arith.constant 0 : index
    %17 = vector.load %arg4[%c0_7, %c0_8] : memref<8x16xf32, #tpu.memory_space<vmem>>, vector<8x16xf32>
    tpu.vector_store %arg4[%c0_7, %c0_8], %16 {strides = array<i32>} : memref<8x16xf32, #tpu.memory_space<vmem>>, vector<8x16xf32>,
    %18 = tpu.iota {dimensions = array<i32: 1>} : vector<8x16xi32>
    %19 = vector.broadcast %7 : vector<8x1xf32> to vector<8x16xf32>
    %20 = arith.cmpf oeq, %5, %19 : vector<8x16xf32>
    %c2147483647_i32 = arith.constant 2147483647 : i32
    %21 = vector.broadcast %c2147483647_i32 : i32 to vector<8x16xi32>
    %22 = arith.select %20, %18, %21 : vector<8x16xi1>, vector<8x16xi32>
    %cst_9 = arith.constant dense<2147483647> : vector<8xi32>
    %23 = vector.multi_reduction <minsi>, %22, %cst_9 [1] : vector<8x16xi32> to vector<8xi32>
    %24 = vector.shape_cast %23 : vector<8xi32> to vector<8x1xi32>
    %25 = arith.mulf %10, %5 : vector<8x16xf32>
    %cst_10 = arith.constant dense<0.000000e+00> : vector<8xf32>
    %26 = vector.multi_reduction <add>, %25, %cst_10 [1] : vector<8x16xf32> to vector<8xf32>
    %27 = vector.shape_cast %26 : vector<8xf32> to vector<8x1xf32>
    %28 = arith.divf %27, %12 : vector<8x1xf32>
    %29 = arith.subf %14, %28 : vector<8x1xf32>
    %30 = arith.mulf %16, %16 : vector<8x16xf32>
    %cst_11 = arith.constant dense<0.000000e+00> : vector<8xf32>
    %31 = vector.multi_reduction <add>, %30, %cst_11 [1] : vector<8x16xf32> to vector<8xf32>
    %32 = vector.shape_cast %31 : vector<8xf32> to vector<8x1xf32>
    %33 = tpu.iota {dimensions = array<i32: 1>} : vector<8x128xi32>
    %c0_i32 = arith.constant 0 : i32
    %34 = vector.broadcast %c0_i32 : i32 to vector<8x128xi32>
    %35 = arith.cmpi eq, %33, %34 : vector<8x128xi32>
    %36 = arith.sitofp %24 : vector<8x1xi32> to vector<8x1xf32>
    %c1_i32 = arith.constant 1 : i32
    %37 = vector.broadcast %c1_i32 : i32 to vector<8x128xi32>
    %38 = arith.cmpi eq, %33, %37 : vector<8x128xi32>
    %39 = vector.shape_cast %29 : vector<8x1xf32> to vector<8x1xf32>
    %40 = vector.broadcast %39 : vector<8x1xf32> to vector<8x128xf32>
    %41 = vector.shape_cast %32 : vector<8x1xf32> to vector<8x1xf32>
    %42 = vector.broadcast %41 : vector<8x1xf32> to vector<8x128xf32>
    %43 = arith.select %38, %40, %42 : vector<8x128xi1>, vector<8x128xf32>
    %44 = vector.shape_cast %36 : vector<8x1xf32> to vector<8x1xf32>
    %45 = vector.broadcast %44 : vector<8x1xf32> to vector<8x128xf32>
    %46 = arith.select %35, %45, %43 : vector<8x128xi1>, vector<8x128xf32>
    %c0_12 = arith.constant 0 : index
    %c0_13 = arith.constant 0 : index
    %47 = vector.load %arg5[%c0_12, %c0_13] : memref<8x128xf32, #tpu.memory_space<vmem>>, vector<8x128xf32>
    tpu.vector_store %arg5[%c0_12, %c0_13], %46 {strides = array<i32>} : memref<8x128xf32, #tpu.memory_space<vmem>>, vector<8x128xf32>,
    return
  }
  func.func @transform_0(%arg0: i32) -> (i32, i32) {
    %c0_i32 = arith.constant 0 : i32
    %c0_i32_0 = arith.constant 0 : i32
    return %arg0, %c0_i32 : i32, i32
  }
  func.func @transform_1(%arg0: i32) -> (i32, i32) {
    %c0_i32 = arith.constant 0 : i32
    %c0_i32_0 = arith.constant 0 : i32
    %c0_i32_1 = arith.constant 0 : i32
    return %c0_i32, %c0_i32_0 : i32, i32
  }
  func.func @transform_2(%arg0: i32) -> (i32, i32) {
    %c0_i32 = arith.constant 0 : i32
    %c0_i32_0 = arith.constant 0 : i32
    %c0_i32_1 = arith.constant 0 : i32
    return %c0_i32, %c0_i32_0 : i32, i32
  }
  func.func @transform_3(%arg0: i32) -> (i32, i32) {
    %c0_i32 = arith.constant 0 : i32
    %c0_i32_0 = arith.constant 0 : i32
    return %arg0, %c0_i32 : i32, i32
  }
  func.func @transform_4(%arg0: i32) -> (i32, i32) {
    %c0_i32 = arith.constant 0 : i32
    %c0_i32_0 = arith.constant 0 : i32
    return %arg0, %c0_i32 : i32, i32
  }
}

</mosaic_0001>

<llo_original>
// kernel: tpu_custom_call.1
$region0: #{tpu_custom_call.1}
  #allocation0 [shape = 'u32[]', space=smem, size = 0x4, offset = 0x4, fixed_abs, tag = 'smem constant byte address 0x4 - core index']
  #allocation1 [shape = 'u32[72,128]{1,0:T(1,128)}', space=vmem, size = 0x9000, scoped, tag = 'internal scratch']
  %s0 = inlined_call_operand.vmem [shape: f32[8,32], index: 0, kind: input, shape index: {}]
  %s1 = inlined_call_operand.vmem [shape: f32[32,16], index: 1, kind: input, shape index: {}]
  %s2 = inlined_call_operand.vmem [shape: f32[1,16], index: 2, kind: input, shape index: {}]
  %s3 = inlined_call_operand.hbm [shape: f32[8,16], index: 3, kind: output, shape index: {0}]
  %s4 = inlined_call_operand.hbm [shape: f32[8,128], index: 4, kind: output, shape index: {1}]
  %5 = xla_tuple %s3, %s4
  %s6 = sld [smem:[#allocation0]]
  $region30: #{tpu_custom_call.1} parent=0
    _
  %s8 = ssub.s32 1, %s6
  %s9 = scalar_select 0, %s8, %s6
  $region1: #{tpu_custom_call.1} parent=0
    #allocation2 [shape = 'u8[4096]{0}', space=vmem, size = 0x1000, scoped, tag = 'output window, operand 0, single buffered']
    #allocation3 [shape = 's32[1]{0}', space=sflag, size = 0x4, scoped, tag = 'scoped memory for tpu_custom_call.1']
    #allocation4 [shape = 'u8[4096]{0}', space=vmem, size = 0x1000, scoped, tag = 'output window, operand 1, single buffered']
    #allocation5 [shape = 's32[1]{0}', space=sflag, size = 0x4, scoped, tag = 'scoped memory for tpu_custom_call.1']
    %10 = vsyncpa [#allocation3], 0
    %11 = vsyncpa [#allocation5], 0
    // Predicated region
    $region2: #{tpu_custom_call.1} parent=1 // pred_check
      _
    $region3: #{tpu_custom_call.1} parent=1 // pred_check_branch
      %13 = sbr.rel (0) target = $region5
    $region4: #{tpu_custom_call.1} parent=1 // pred_region
      _
    $region5: #{tpu_custom_call.1} parent=1 // pred_fallthru
      _
    // Predicated region
    $region6: #{tpu_custom_call.1} parent=1 // pred_check
      _
    $region7: #{tpu_custom_call.1} parent=1 // pred_check_branch
      %15 = sbr.rel (0) target = $region9
    $region8: #{tpu_custom_call.1} parent=1 // pred_region
      _
    $region9: #{tpu_custom_call.1} parent=1 // pred_fallthru
      _
    // Predicated region
    $region10: #{tpu_custom_call.1} parent=1 // pred_check
      _
    $region11: #{tpu_custom_call.1} parent=1 // pred_check_branch
      %17 = sbr.rel (0) target = $region13
    $region12: #{tpu_custom_call.1} parent=1 // pred_region
      _
    $region13: #{tpu_custom_call.1} parent=1 // pred_fallthru
      _
    %v18 = vld [vmem:[%s0] sm:$0xff]
    %v19 = vld [vmem:[%s1] sm:$0xff]
    %v20 = vld [vmem:[%s1 + $0x8] sm:$0xff]
    %v21 = vld [vmem:[%s1 + $0x10] sm:$0xff]
    %v22 = vld [vmem:[%s1 + $0x18] sm:$0xff]
    %v23 = vld [vmem:[%s2] sm:$0x1]
    %v25 = vperm.slane %v23, 0
    %vm27 = vcmask 261120
    %v29 = vsel %vm27, %v18, 0
    %31 = vmatpush.msra.mxu0 0.0
    %32 = vmatpush.msra.mxu0 0.0
    %33 = vmatpush.msra.mxu0 0.0
    %34 = vmatpush.msra.mxu0 0.0
    %35 = vmatpush.msra.mxu0 0.0
    %36 = vmatpush.msra.mxu0 0.0
    %37 = vmatpush.msra.mxu0 0.0
    %38 = vmatpush.msra.mxu0 0.0
    %39 = vmatpush.msra.mxu0 0.0
    %40 = vmatpush.msra.mxu0 0.0
    %41 = vmatpush.msra.mxu0 0.0
    %42 = vmatpush.msra.mxu0 0.0
    %43 = vmatpush.msra.mxu0 %v22
    %44 = vmatpush.msra.mxu0 %v21
    %45 = vmatpush.msra.mxu0 %v20
    %46 = vmatpush.msra.mxu0 %v19
    %47 = vmatmul.f32.gmra.mxu0 %v29
    %v48 = vpop.f32.mrf.mxu0
    %v49 = vadd.f32 %v25, %v48
    %50 = vdwg.mxu0
    %vm51 = vcmask 130048
    %v52 = vsel %vm51, %v49, -inf
    %53 = vmax.xlane.f32.xlu0 %v52
    %v54 = vpop.xlane.xlu0 %53
    %v55 = vsub.f32 %v49, %v54
    %v56 = vmul.f32 %v55, 1.442695
    %v57 = vpow.pop %v56
    %v58 = vsel %vm51, %v57, 0.0
    %59 = vadd.xlane.f32.xlu0 %v58
    %v60 = vpop.xlane.xlu0 %59
    %v61 = vlog2.pop %v60
    %v62 = vmul.f32 %v61, 0.6931472
    %v63 = vadd.f32 %v54, %v62
    %v64 = vsub.f32 %v49, %v63
    %65 = vst.msk [vmem:[#allocation2] sm:$0xff] %vm51, %v64
    %v66 = vlaneseq
    %v67 = vand.u32 %v66, 127
    %vm68 = vcmp.eq.f32.partialorder %v49, %v54
    %v69 = vsel %vm68, %v67, 2147483647
    %v70 = vsel %vm51, %v69, 2147483647
    %v71 = vand.u32 %v70, 65535
    %v72 = vshra.s32 %v70, 16
    %v73 = vcvt.s32.f32 %v71
    %v74 = vcvt.s32.f32 %v72
    %75 = vmin.xlane.f32.xlu0 %v74
    %v76 = vpop.xlane.xlu0 %75
    %vm77 = vcmp.eq.f32.partialorder %v74, %v76
    %v78 = vsel %vm77, %v73, inf
    %79 = vmin.xlane.f32.xlu0 %v78
    %v80 = vpop.xlane.xlu0 %79
    %v81 = vcvt.f32.s32 %v80
    %v82 = vcvt.f32.s32 %v76
    %v83 = vshll.u32 %v82, 16
    %v84 = vadd.s32 %v83, %v81
    %v85 = vmul.f32 %v57, %v49
    %v86 = vsel %vm51, %v85, 0.0
    %87 = vadd.xlane.f32.xlu0 %v86
    %v88 = vpop.xlane.xlu0 %87
    %v89 = vrcp.pop %v60
    %v90 = vmul.f32 %v60, %v89
    %v91 = vsub.f32 1.0, %v90
    %v92 = vmul.f32 %v89, %v91
    %v93 = vadd.f32 %v89, %v92
    %vm94 = vweird.f32 %v60
    %vm95 = vweird.f32 %v89
    %vm96 = vmor %vm94, %vm95
    %v97 = vsel %vm96, %v89, %v93
    %v98 = vand.u32 2147483647, %v60
    %vm99 = vcmp.eq.f32.partialorder %v98, 8.507059e+37
    %v100 = vand.u32 %v60, 2147483648
    %v101 = vor.u32 1.1754944e-38, %v100
    %v102 = vsel %vm99, %v101, %v97
    %v103 = vmul.f32 %v88, %v102
    %v104 = vsub.f32 %v63, %v103
    %v105 = vmul.f32 %v64, %v64
    %v106 = vsel %vm51, %v105, 0.0
    %107 = vadd.xlane.f32.xlu0 %v106
    %v108 = vpop.xlane.xlu0 %107
    %vm109 = vcmp.eq.s32.totalorder %v67, 0
    %v110 = vcvt.s32.f32 %v84
    %vm111 = vcmp.eq.s32.totalorder %v67, 1
    %v112 = vsel %vm111, %v104, %v108
    %v113 = vsel %vm109, %v110, %v112
    %114 = vst [vmem:[#allocation4] sm:$0xff] %v113
    // Predicated region
    $region14: #{tpu_custom_call.1} parent=1 // pred_check
      _
    $region15: #{tpu_custom_call.1} parent=1 // pred_check_branch
      %116 = sbr.rel (0) target = $region17
    $region16: #{tpu_custom_call.1} parent=1 // pred_region
      %118 = vsyncadd [#allocation3], 0
      %s120 = sshll.u32 [#allocation2], 4
      %s121 = int_to_ptr.vmem [resolvable:$true] %s120
      %s122 = sshll.u32 %s3, 4
      %s123 = int_to_ptr.hbm [resolvable:$true] %s122
      %125 = dma.vmem_to_hbm [thread:$0]  %s121, 128, %s123, [#allocation3]
    $region17: #{tpu_custom_call.1} parent=1 // pred_fallthru
      _
    // Predicated region
    $region18: #{tpu_custom_call.1} parent=1 // pred_check
      _
    $region19: #{tpu_custom_call.1} parent=1 // pred_check_branch
      %127 = sbr.rel (0) target = $region21
    $region20: #{tpu_custom_call.1} parent=1 // pred_region
      %129 = vsyncadd [#allocation5], 0
      %s131 = sshll.u32 [#allocation4], 4
      %s132 = int_to_ptr.vmem [resolvable:$true] %s131
      %s133 = sshll.u32 %s4, 4
      %s134 = int_to_ptr.hbm [resolvable:$true] %s133
      %136 = dma.vmem_to_hbm [thread:$0]  %s132, 128, %s134, [#allocation5]
    $region21: #{tpu_custom_call.1} parent=1 // pred_fallthru
      _
    // Predicated region
    $region22: #{tpu_custom_call.1} parent=1 // pred_check
      _
    $region23: #{tpu_custom_call.1} parent=1 // pred_check_branch
      %138 = sbr.rel (0) target = $region25
    $region24: #{tpu_custom_call.1} parent=1 // pred_region
      %140 = dma.done [#allocation3], 128
    $region25: #{tpu_custom_call.1} parent=1 // pred_fallthru
      _
    // Predicated region
    $region26: #{tpu_custom_call.1} parent=1 // pred_check
      _
    $region27: #{tpu_custom_call.1} parent=1 // pred_check_branch
      %142 = sbr.rel (0) target = $region29
    $region28: #{tpu_custom_call.1} parent=1 // pred_region
      %144 = dma.done [#allocation5], 128
    $region29: #{tpu_custom_call.1} parent=1 // pred_fallthru
      _
    %145 = vsyncpa [#allocation3], 1
    %146 = vsyncpa [#allocation5], 1

</llo_original>
